<compile_context>
chip_gen: v7x
topology: tpu7x:2x2x1
jax: 0.10.0
libtpu: 0.0.40
codegen_flags: <defaults>
</compile_context>

<pallas_src>
import functools

import jax
import jax.numpy as jnp
from jax.experimental import pallas as pl
from jax.experimental.pallas import tpu as pltpu

EPS = 1e-5


def resblock_kernel(x_ref, wb1_ref, wb2_ref, g1_ref, be1_ref, g2_ref, be2_ref,
                    fold_ref, o_ref, *, n, h, w, c):
    """Single-step, fully VMEM-resident ResBlock in lane-dense (N*H, W*C) layout.

    x_ref    : (N*H, W*C)     f32   input (also the residual -- read once)
    wb*_ref  : (3*W*C, W*C)   bf16  banded conv weights (w-shifts + channel mix folded in)
    g*/be*   : (1, W*C)       f32   BN gamma / beta, tiled across W
    fold_ref : (W*C, W*C)     f32   tiled identity: per-(w,c) sums -> per-channel sums
    o_ref    : (N*H, W*C)     f32
    """
    rows = n * h
    lanes = w * c
    inv_cnt = 1.0 / float(n * h * w)

    x = x_ref[...]                                                    # (R, L) f32

    # h-index of each row (row = n*H + h): zeroes the vertical halo taps at image borders.
    row_h = jax.lax.broadcasted_iota(jnp.int32, (rows, lanes), 0) % h
    zrow = jnp.zeros((1, lanes), jnp.float32)

    def conv_operand(src):
        """Build the (R, 3*L) bf16 operand for one 3x3 'same' conv (one MXU matmul).

        Horizontal taps and their zero padding are inside the banded weight matrix;
        vertical taps are two row-shifted copies with h==0 / h==H-1 rows zeroed.
        """
        up = jnp.concatenate([zrow, src[:rows - 1, :]], axis=0)       # tap at h-1
        up = jnp.where(row_h == 0, 0.0, up)
        down = jnp.concatenate([src[1:, :], zrow], axis=0)            # tap at h+1
        down = jnp.where(row_h == h - 1, 0.0, down)
        return jnp.concatenate([up, src, down], axis=-1).astype(jnp.bfloat16)

    def batch_norm(y, g_ref, be_ref):
        # Training-mode BN: biased batch statistics per channel over (N, H, W).
        s1 = jnp.sum(y, axis=0, keepdims=True)                        # (1, L)
        s2 = jnp.sum(y * y, axis=0, keepdims=True)                    # (1, L)
        stats = jnp.dot(jnp.concatenate([s1, s2], axis=0), fold_ref[...],
                        preferred_element_type=jnp.float32)           # (2, L) per-channel sums
        mean = stats[0:1, :] * inv_cnt
        var = stats[1:2, :] * inv_cnt - mean * mean
        return (y - mean) * jax.lax.rsqrt(var + EPS) * g_ref[...] + be_ref[...]

    # conv_1 -> BN -> ReLU   (conv bias omitted: exactly cancelled by BN mean subtraction)
    y1 = jnp.dot(conv_operand(x), wb1_ref[...], preferred_element_type=jnp.float32)
    y1 = jnp.maximum(batch_norm(y1, g1_ref, be1_ref), 0.0)

    # conv_2 -> BN -> +residual -> ReLU
    y2 = jnp.dot(conv_operand(y1), wb2_ref[...], preferred_element_type=jnp.float32)
    y2 = batch_norm(y2, g2_ref, be2_ref)
    o_ref[...] = jnp.maximum(y2 + x, 0.0)                             # lane-dense 128-wide store


def _band_weights(w_hwio, w_spatial):
    """(3, 3, C, C) HWIO conv weights -> (3*W*C, W*C) banded matrix.

    band[kh, wp*C+ci, wq*C+co] = w_hwio[kh, wp-wq+1, ci, co] inside the band (else 0), so the
    horizontal 3-tap stencil and its zero padding happen inside the MXU matmul.
    """
    c = w_hwio.shape[2]
    l = w_spatial * c
    band = jnp.zeros((3, l, l), jnp.float32)
    for kh in range(3):
        for wq in range(w_spatial):
            for kw in range(3):
                wp = wq + kw - 1
                if 0 <= wp < w_spatial:
                    band = band.at[kh, wp * c:(wp + 1) * c, wq * c:(wq + 1) * c].set(
                        w_hwio[kh, kw])
    return band.reshape(3 * l, l)


def res_block_pallas(x_nhwc, params):
    n, h, w, c = x_nhwc.shape
    l = w * c
    (w1, b1, g1, be1, w2, b2, g2, be2) = params
    del b1, b2  # per-channel conv bias is a no-op under training-mode BN (mean-subtracted)

    # Fold (W, C) into the 128-wide lane axis; reshape of a contiguous HBM array is free.
    x2d = x_nhwc.reshape(n * h, l)

    # One-time weight / parameter layout prep (bf16 operands halve weight DMA bytes too).
    wb1 = _band_weights(w1, w).astype(jnp.bfloat16)
    wb2 = _band_weights(w2, w).astype(jnp.bfloat16)
    g1t, be1t = jnp.tile(g1, (1, w)), jnp.tile(be1, (1, w))
    g2t, be2t = jnp.tile(g2, (1, w)), jnp.tile(be2, (1, w))
    fold = jnp.tile(jnp.eye(c, dtype=jnp.float32), (w, w))            # (L, L)

    kernel = functools.partial(resblock_kernel, n=n, h=h, w=w, c=c)
    out2d = pl.pallas_call(
        kernel,
        out_shape=jax.ShapeDtypeStruct((n * h, l), jnp.float32),
        in_specs=[pl.BlockSpec(memory_space=pltpu.MemorySpace.VMEM) for _ in range(8)],
        out_specs=pl.BlockSpec(memory_space=pltpu.MemorySpace.VMEM),
    )(x2d, wb1, wb2, g1t, be1t, g2t, be2t, fold)
    return out2d.reshape(n, h, w, c)


def res_block_reference(x_nhwc, params, conv_dtype=jnp.float32):
    """Pure-JAX reference mirroring the PyTorch forward (NHWC).

    conv_dtype controls the conv operand precision so we can also check against an
    MXU-faithful (bf16 operand / f32 accumulate) reference.
    """
    (w1, b1, g1, be1, w2, b2, g2, be2) = params

    def conv(x, wgt, b):
        y = jax.lax.conv_general_dilated(
            x.astype(conv_dtype), wgt.astype(conv_dtype),
            window_strides=(1, 1), padding="SAME",
            dimension_numbers=("NHWC", "HWIO", "NHWC"),
            preferred_element_type=jnp.float32)
        return y + b.reshape(1, 1, 1, -1)

    def bn(y, g, be):
        m = jnp.mean(y, axis=(0, 1, 2), keepdims=True)
        v = jnp.mean((y - m) ** 2, axis=(0, 1, 2), keepdims=True)
        return (y - m) / jnp.sqrt(v + EPS) * g.reshape(1, 1, 1, -1) + be.reshape(1, 1, 1, -1)

    y = jax.nn.relu(bn(conv(x_nhwc, w1, b1.reshape(-1)), g1.reshape(-1), be1.reshape(-1)))
    y = bn(conv(y, w2, b2.reshape(-1)), g2.reshape(-1), be2.reshape(-1))
    return jax.nn.relu(y + x_nhwc)


def init_params(key, c):
    """Deterministic init matching PyTorch Conv2d / BatchNorm2d default shapes."""
    k1, k2, k3, k4 = jax.random.split(key, 4)
    bound = 1.0 / jnp.sqrt(c * 3.0 * 3.0)
    w1_oihw = jax.random.uniform(k1, (c, c, 3, 3), jnp.float32, -bound, bound)
    w2_oihw = jax.random.uniform(k2, (c, c, 3, 3), jnp.float32, -bound, bound)
    w1 = jnp.transpose(w1_oihw, (2, 3, 1, 0))   # OIHW -> HWIO
    w2 = jnp.transpose(w2_oihw, (2, 3, 1, 0))
    b1 = jax.random.uniform(k3, (1, c), jnp.float32, -bound, bound)
    b2 = jax.random.uniform(k4, (1, c), jnp.float32, -bound, bound)
    g1 = jnp.ones((1, c), jnp.float32)
    be1 = jnp.zeros((1, c), jnp.float32)
    g2 = jnp.ones((1, c), jnp.float32)
    be2 = jnp.zeros((1, c), jnp.float32)
    return (w1, b1, g1, be1, w2, b2, g2, be2)


if __name__ == "__main__":
    N, C, H, W = 2, 16, 8, 8   # W * C = 128 -> one full lane register per folded row

    key = jax.random.PRNGKey(0)
    kx, kp = jax.random.split(key)
    x_nchw = jax.random.normal(kx, (N, C, H, W), jnp.float32)   # PyTorch-style input
    x_nhwc = jnp.transpose(x_nchw, (0, 2, 3, 1))                # kernel layout

    params = init_params(kp, C)

    out = jax.block_until_ready(res_block_pallas(x_nhwc, params))
    ref_bf16 = jax.block_until_ready(
        res_block_reference(x_nhwc, params, conv_dtype=jnp.bfloat16))
    ref_f32 = jax.block_until_ready(res_block_reference(x_nhwc, params))

    assert out.shape == (N, H, W, C)
    # Tight check vs. a reference that also feeds bf16 operands to the conv (MXU-faithful).
    assert jnp.max(jnp.abs(out - ref_bf16)) < 5e-3, "mismatch vs bf16-operand reference"
    # Loose check vs. the pure-f32 PyTorch-semantics reference (only bf16 operand rounding).
    assert jnp.max(jnp.abs(out - ref_f32)) < 5e-2, "mismatch vs f32 reference"

    print("KERNEL_OK")
</pallas_src>

<mosaic_0001>
module attributes {stable_mosaic.version = 11 : i64} {
  func.func @resblock_kernel(%arg0: memref<16x128xf32, #tpu.memory_space<vmem>>, %arg1: memref<384x128xbf16, #tpu.memory_space<vmem>>, %arg2: memref<384x128xbf16, #tpu.memory_space<vmem>>, %arg3: memref<1x128xf32, #tpu.memory_space<vmem>>, %arg4: memref<1x128xf32, #tpu.memory_space<vmem>>, %arg5: memref<1x128xf32, #tpu.memory_space<vmem>>, %arg6: memref<1x128xf32, #tpu.memory_space<vmem>>, %arg7: memref<128x128xf32, #tpu.memory_space<vmem>>, %arg8: memref<16x128xf32, #tpu.memory_space<vmem>>) attributes {dimension_semantics = [], scalar_prefetch = 0 : i64, scratch_operands = 0 : i64, tpu.core_type = #tpu.core_type<tc>} {
    %c0 = arith.constant 0 : index
    %c0_0 = arith.constant 0 : index
    %0 = vector.load %arg0[%c0, %c0_0] : memref<16x128xf32, #tpu.memory_space<vmem>>, vector<16x128xf32>
    %1 = tpu.iota {dimensions = array<i32: 0>} : vector<16x128xi32>
    %c8_i32 = arith.constant 8 : i32
    %c0_i32 = arith.constant 0 : i32
    %2 = arith.cmpi eq, %c8_i32, %c0_i32 : i32
    %c1_i32 = arith.constant 1 : i32
    %3 = arith.select %2, %c1_i32, %c8_i32 : i32
    %4 = vector.broadcast %3 : i32 to vector<16x128xi32>
    %5 = arith.remsi %1, %4 : vector<16x128xi32>
    %c0_i32_1 = arith.constant 0 : i32
    %6 = vector.broadcast %c0_i32_1 : i32 to vector<16x128xi32>
    %7 = arith.cmpi ne, %5, %6 : vector<16x128xi32>
    %c0_i32_2 = arith.constant 0 : i32
    %8 = vector.broadcast %c0_i32_2 : i32 to vector<16x128xi32>
    %9 = arith.cmpi slt, %5, %8 : vector<16x128xi32>
    %c0_i32_3 = arith.constant 0 : i32
    %10 = arith.cmpi slt, %3, %c0_i32_3 : i32
    %11 = vector.broadcast %10 : i1 to vector<16x128xi1>
    %12 = vector.broadcast %11 : vector<16x128xi1> to vector<16x128xi1>
    %13 = arith.xori %9, %12 : vector<16x128xi1>
    %14 = arith.andi %13, %7 : vector<16x128xi1>
    %15 = vector.broadcast %3 : i32 to vector<16x128xi32>
    %16 = arith.addi %5, %15 : vector<16x128xi32>
    %17 = arith.select %14, %16, %5 : vector<16x128xi1>, vector<16x128xi32>
    %cst = arith.constant 0.000000e+00 : f32
    %18 = vector.broadcast %cst : f32 to vector<1x128xf32>
    %19 = vector.extract_strided_slice %0 {offsets = [0, 0], sizes = [15, 128], strides = [1, 1]} : vector<16x128xf32> to vector<15x128xf32>
    %20 = tpu.concatenate %18, %19 in 0 : vector<1x128xf32>, vector<15x128xf32> -> vector<16x128xf32>
    %c0_i32_4 = arith.constant 0 : i32
    %21 = vector.broadcast %c0_i32_4 : i32 to vector<16x128xi32>
    %22 = arith.cmpi eq, %17, %21 : vector<16x128xi32>
    %cst_5 = arith.constant 0.000000e+00 : f32
    %23 = vector.broadcast %cst_5 : f32 to vector<16x128xf32>
    %24 = arith.select %22, %23, %20 : vector<16x128xi1>, vector<16x128xf32>
    %25 = vector.extract_strided_slice %0 {offsets = [1, 0], sizes = [15, 128], strides = [1, 1]} : vector<16x128xf32> to vector<15x128xf32>
    %26 = tpu.concatenate %25, %18 in 0 : vector<15x128xf32>, vector<1x128xf32> -> vector<16x128xf32>
    %c7_i32 = arith.constant 7 : i32
    %27 = vector.broadcast %c7_i32 : i32 to vector<16x128xi32>
    %28 = arith.cmpi eq, %17, %27 : vector<16x128xi32>
    %cst_6 = arith.constant 0.000000e+00 : f32
    %29 = vector.broadcast %cst_6 : f32 to vector<16x128xf32>
    %30 = arith.select %28, %29, %26 : vector<16x128xi1>, vector<16x128xf32>
    %31 = tpu.concatenate %24, %0, %30 in 1 : vector<16x128xf32>, vector<16x128xf32>, vector<16x128xf32> -> vector<16x384xf32>
    %32 = arith.truncf %31 : vector<16x384xf32> to vector<16x384xbf16>
    %c0_7 = arith.constant 0 : index
    %c0_8 = arith.constant 0 : index
    %33 = vector.load %arg1[%c0_7, %c0_8] : memref<384x128xbf16, #tpu.memory_space<vmem>>, vector<384x128xbf16>
    %cst_9 = arith.constant dense<0.000000e+00> : vector<16x128xf32>
    %34 = tpu.matmul %32, %33, %cst_9 {dimension_numbers = #tpu.dot_dimension_numbers<[1], [0], [0], [1], [0, 0, 1, 1], [], []>} : vector<16x384xbf16>, vector<384x128xbf16>, vector<16x128xf32> -> vector<16x128xf32>
    %cst_10 = arith.constant dense<0.000000e+00> : vector<128xf32>
    %35 = vector.multi_reduction <add>, %34, %cst_10 [0] : vector<16x128xf32> to vector<128xf32>
    %36 = vector.shape_cast %35 : vector<128xf32> to vector<1x128xf32>
    %37 = arith.mulf %34, %34 : vector<16x128xf32>
    %cst_11 = arith.constant dense<0.000000e+00> : vector<128xf32>
    %38 = vector.multi_reduction <add>, %37, %cst_11 [0] : vector<16x128xf32> to vector<128xf32>
    %39 = vector.shape_cast %38 : vector<128xf32> to vector<1x128xf32>
    %40 = tpu.concatenate %36, %39 in 0 : vector<1x128xf32>, vector<1x128xf32> -> vector<2x128xf32>
    %c0_12 = arith.constant 0 : index
    %c0_13 = arith.constant 0 : index
    %41 = vector.load %arg7[%c0_12, %c0_13] : memref<128x128xf32, #tpu.memory_space<vmem>>, vector<128x128xf32>
    %cst_14 = arith.constant dense<0.000000e+00> : vector<2x128xf32>
    %42 = tpu.matmul %40, %41, %cst_14 {dimension_numbers = #tpu.dot_dimension_numbers<[1], [0], [0], [1], [0, 0, 1, 1], [], []>} : vector<2x128xf32>, vector<128x128xf32>, vector<2x128xf32> -> vector<2x128xf32>
    %43 = vector.extract_strided_slice %42 {offsets = [0, 0], sizes = [1, 128], strides = [1, 1]} : vector<2x128xf32> to vector<1x128xf32>
    %cst_15 = arith.constant 7.812500e-03 : f32
    %44 = vector.broadcast %cst_15 : f32 to vector<1x128xf32>
    %45 = arith.mulf %43, %44 : vector<1x128xf32>
    %46 = vector.extract_strided_slice %42 {offsets = [1, 0], sizes = [1, 128], strides = [1, 1]} : vector<2x128xf32> to vector<1x128xf32>
    %cst_16 = arith.constant 7.812500e-03 : f32
    %47 = vector.broadcast %cst_16 : f32 to vector<1x128xf32>
    %48 = arith.mulf %46, %47 : vector<1x128xf32>
    %49 = arith.mulf %45, %45 : vector<1x128xf32>
    %50 = arith.subf %48, %49 : vector<1x128xf32>
    %51 = vector.broadcast %45 : vector<1x128xf32> to vector<16x128xf32>
    %52 = arith.subf %34, %51 : vector<16x128xf32>
    %cst_17 = arith.constant 9.99999974E-6 : f32
    %53 = vector.broadcast %cst_17 : f32 to vector<1x128xf32>
    %54 = arith.addf %50, %53 : vector<1x128xf32>
    %55 = math.rsqrt %54 : vector<1x128xf32>
    %56 = vector.broadcast %55 : vector<1x128xf32> to vector<16x128xf32>
    %57 = arith.mulf %52, %56 : vector<16x128xf32>
    %c0_18 = arith.constant 0 : index
    %c0_19 = arith.constant 0 : index
    %58 = vector.load %arg3[%c0_18, %c0_19] : memref<1x128xf32, #tpu.memory_space<vmem>>, vector<1x128xf32>
    %59 = vector.broadcast %58 : vector<1x128xf32> to vector<16x128xf32>
    %60 = arith.mulf %57, %59 : vector<16x128xf32>
    %c0_20 = arith.constant 0 : index
    %c0_21 = arith.constant 0 : index
    %61 = vector.load %arg4[%c0_20, %c0_21] : memref<1x128xf32, #tpu.memory_space<vmem>>, vector<1x128xf32>
    %62 = vector.broadcast %61 : vector<1x128xf32> to vector<16x128xf32>
    %63 = arith.addf %60, %62 : vector<16x128xf32>
    %cst_22 = arith.constant 0.000000e+00 : f32
    %64 = vector.broadcast %cst_22 : f32 to vector<16x128xf32>
    %65 = arith.maximumf %63, %64 : vector<16x128xf32>
    %66 = vector.extract_strided_slice %65 {offsets = [0, 0], sizes = [15, 128], strides = [1, 1]} : vector<16x128xf32> to vector<15x128xf32>
    %67 = tpu.concatenate %18, %66 in 0 : vector<1x128xf32>, vector<15x128xf32> -> vector<16x128xf32>
    %c0_i32_23 = arith.constant 0 : i32
    %68 = vector.broadcast %c0_i32_23 : i32 to vector<16x128xi32>
    %69 = arith.cmpi eq, %17, %68 : vector<16x128xi32>
    %cst_24 = arith.constant 0.000000e+00 : f32
    %70 = vector.broadcast %cst_24 : f32 to vector<16x128xf32>
    %71 = arith.select %69, %70, %67 : vector<16x128xi1>, vector<16x128xf32>
    %72 = vector.extract_strided_slice %65 {offsets = [1, 0], sizes = [15, 128], strides = [1, 1]} : vector<16x128xf32> to vector<15x128xf32>
    %73 = tpu.concatenate %72, %18 in 0 : vector<15x128xf32>, vector<1x128xf32> -> vector<16x128xf32>
    %c7_i32_25 = arith.constant 7 : i32
    %74 = vector.broadcast %c7_i32_25 : i32 to vector<16x128xi32>
    %75 = arith.cmpi eq, %17, %74 : vector<16x128xi32>
    %cst_26 = arith.constant 0.000000e+00 : f32
    %76 = vector.broadcast %cst_26 : f32 to vector<16x128xf32>
    %77 = arith.select %75, %76, %73 : vector<16x128xi1>, vector<16x128xf32>
    %78 = tpu.concatenate %71, %65, %77 in 1 : vector<16x128xf32>, vector<16x128xf32>, vector<16x128xf32> -> vector<16x384xf32>
    %79 = arith.truncf %78 : vector<16x384xf32> to vector<16x384xbf16>
    %c0_27 = arith.constant 0 : index
    %c0_28 = arith.constant 0 : index
    %80 = vector.load %arg2[%c0_27, %c0_28] : memref<384x128xbf16, #tpu.memory_space<vmem>>, vector<384x128xbf16>
    %cst_29 = arith.constant dense<0.000000e+00> : vector<16x128xf32>
    %81 = tpu.matmul %79, %80, %cst_29 {dimension_numbers = #tpu.dot_dimension_numbers<[1], [0], [0], [1], [0, 0, 1, 1], [], []>} : vector<16x384xbf16>, vector<384x128xbf16>, vector<16x128xf32> -> vector<16x128xf32>
    %cst_30 = arith.constant dense<0.000000e+00> : vector<128xf32>
    %82 = vector.multi_reduction <add>, %81, %cst_30 [0] : vector<16x128xf32> to vector<128xf32>
    %83 = vector.shape_cast %82 : vector<128xf32> to vector<1x128xf32>
    %84 = arith.mulf %81, %81 : vector<16x128xf32>
    %cst_31 = arith.constant dense<0.000000e+00> : vector<128xf32>
    %85 = vector.multi_reduction <add>, %84, %cst_31 [0] : vector<16x128xf32> to vector<128xf32>
    %86 = vector.shape_cast %85 : vector<128xf32> to vector<1x128xf32>
    %87 = tpu.concatenate %83, %86 in 0 : vector<1x128xf32>, vector<1x128xf32> -> vector<2x128xf32>
    %c0_32 = arith.constant 0 : index
    %c0_33 = arith.constant 0 : index
    %88 = vector.load %arg7[%c0_32, %c0_33] : memref<128x128xf32, #tpu.memory_space<vmem>>, vector<128x128xf32>
    %cst_34 = arith.constant dense<0.000000e+00> : vector<2x128xf32>
    %89 = tpu.matmul %87, %88, %cst_34 {dimension_numbers = #tpu.dot_dimension_numbers<[1], [0], [0], [1], [0, 0, 1, 1], [], []>} : vector<2x128xf32>, vector<128x128xf32>, vector<2x128xf32> -> vector<2x128xf32>
    %90 = vector.extract_strided_slice %89 {offsets = [0, 0], sizes = [1, 128], strides = [1, 1]} : vector<2x128xf32> to vector<1x128xf32>
    %cst_35 = arith.constant 7.812500e-03 : f32
    %91 = vector.broadcast %cst_35 : f32 to vector<1x128xf32>
    %92 = arith.mulf %90, %91 : vector<1x128xf32>
    %93 = vector.extract_strided_slice %89 {offsets = [1, 0], sizes = [1, 128], strides = [1, 1]} : vector<2x128xf32> to vector<1x128xf32>
    %cst_36 = arith.constant 7.812500e-03 : f32
    %94 = vector.broadcast %cst_36 : f32 to vector<1x128xf32>
    %95 = arith.mulf %93, %94 : vector<1x128xf32>
    %96 = arith.mulf %92, %92 : vector<1x128xf32>
    %97 = arith.subf %95, %96 : vector<1x128xf32>
    %98 = vector.broadcast %92 : vector<1x128xf32> to vector<16x128xf32>
    %99 = arith.subf %81, %98 : vector<16x128xf32>
    %cst_37 = arith.constant 9.99999974E-6 : f32
    %100 = vector.broadcast %cst_37 : f32 to vector<1x128xf32>
    %101 = arith.addf %97, %100 : vector<1x128xf32>
    %102 = math.rsqrt %101 : vector<1x128xf32>
    %103 = vector.broadcast %102 : vector<1x128xf32> to vector<16x128xf32>
    %104 = arith.mulf %99, %103 : vector<16x128xf32>
    %c0_38 = arith.constant 0 : index
    %c0_39 = arith.constant 0 : index
    %105 = vector.load %arg5[%c0_38, %c0_39] : memref<1x128xf32, #tpu.memory_space<vmem>>, vector<1x128xf32>
    %106 = vector.broadcast %105 : vector<1x128xf32> to vector<16x128xf32>
    %107 = arith.mulf %104, %106 : vector<16x128xf32>
    %c0_40 = arith.constant 0 : index
    %c0_41 = arith.constant 0 : index
    %108 = vector.load %arg6[%c0_40, %c0_41] : memref<1x128xf32, #tpu.memory_space<vmem>>, vector<1x128xf32>
    %109 = vector.broadcast %108 : vector<1x128xf32> to vector<16x128xf32>
    %110 = arith.addf %107, %109 : vector<16x128xf32>
    %111 = arith.addf %110, %0 : vector<16x128xf32>
    %cst_42 = arith.constant 0.000000e+00 : f32
    %112 = vector.broadcast %cst_42 : f32 to vector<16x128xf32>
    %113 = arith.maximumf %111, %112 : vector<16x128xf32>
    %c0_43 = arith.constant 0 : index
    %c0_44 = arith.constant 0 : index
    %114 = vector.load %arg8[%c0_43, %c0_44] : memref<16x128xf32, #tpu.memory_space<vmem>>, vector<16x128xf32>
    tpu.vector_store %arg8[%c0_43, %c0_44], %113 {strides = array<i32>} : memref<16x128xf32, #tpu.memory_space<vmem>>, vector<16x128xf32>,
    return
  }
}

</mosaic_0001>

<llo_original>
// kernel: tpu_custom_call.1
$region0: #{tpu_custom_call.1}
  #allocation0 [shape = 'u32[]', space=smem, size = 0x4, offset = 0x4, fixed_abs, tag = 'smem constant byte address 0x4 - core index']
  #allocation1 [shape = 'u32[144,128]{1,0:T(1,128)}', space=vmem, size = 0x12000, scoped, tag = 'internal scratch']
  %s0 = inlined_call_operand.hbm [shape: f32[16,128], index: 0, kind: input, shape index: {}]
  %s1 = inlined_call_operand.hbm [shape: bf16[384,128], index: 1, kind: input, shape index: {}]
  %s2 = inlined_call_operand.hbm [shape: bf16[384,128], index: 2, kind: input, shape index: {}]
  %s3 = inlined_call_operand.vmem [shape: f32[1,128], index: 3, kind: input, shape index: {}]
  %s4 = inlined_call_operand.vmem [shape: f32[1,128], index: 4, kind: input, shape index: {}]
  %s5 = inlined_call_operand.vmem [shape: f32[1,128], index: 5, kind: input, shape index: {}]
  %s6 = inlined_call_operand.vmem [shape: f32[1,128], index: 6, kind: input, shape index: {}]
  %s7 = inlined_call_operand.hbm [shape: f32[128,128], index: 7, kind: input, shape index: {}]
  %s8 = inlined_call_operand.hbm [shape: f32[16,128], index: 8, kind: output, shape index: {}]
  %s9 = sld [smem:[#allocation0]]
  $region58: #{tpu_custom_call.1} parent=0
    _
  %s11 = ssub.s32 1, %s9
  %s12 = scalar_select 0, %s11, %s9
  $region1: #{tpu_custom_call.1} parent=0
    #allocation2 [shape = 'u8[8192]{0}', space=vmem, size = 0x2000, scoped, tag = 'input window, operand 0, single buffered']
    #allocation3 [shape = 's32[1]{0}', space=sflag, size = 0x4, scoped, tag = 'scoped memory for tpu_custom_call.1']
    #allocation4 [shape = 's32[1]{0}', space=sflag, size = 0x4, scoped, tag = 'scoped memory for tpu_custom_call.1']
    #allocation5 [shape = 'u8[98304]{0}', space=vmem, size = 0x18000, scoped, tag = 'input window, operand 1, single buffered']
    #allocation6 [shape = 's32[1]{0}', space=sflag, size = 0x4, scoped, tag = 'scoped memory for tpu_custom_call.1']
    #allocation7 [shape = 'u8[98304]{0}', space=vmem, size = 0x18000, scoped, tag = 'input window, operand 2, single buffered']
    #allocation8 [shape = 'u8[65536]{0}', space=vmem, size = 0x10000, scoped, tag = 'input window, operand 7, single buffered']
    #allocation9 [shape = 's32[1]{0}', space=sflag, size = 0x4, scoped, tag = 'scoped memory for tpu_custom_call.1']
    #allocation10 [shape = 'u8[8192]{0}', space=vmem, size = 0x2000, scoped, tag = 'output window, operand 0, single buffered']
    %13 = vsyncpa [#allocation3], 0
    %14 = vsyncpa [#allocation6], 0
    %15 = vsyncpa [#allocation9], 0
    %16 = vsyncpa [#allocation4], 0
    // Predicated region
    $region2: #{tpu_custom_call.1} parent=1 // pred_check
      _
    $region3: #{tpu_custom_call.1} parent=1 // pred_check_branch
      %18 = sbr.rel (0) target = $region5
    $region4: #{tpu_custom_call.1} parent=1 // pred_region
      %s20 = ssub.s32 256, 256
      %21 = vsyncadd [#allocation3], %s20
      %s22 = sshll.u32 [#allocation2], 4
      %s23 = int_to_ptr.vmem [resolvable:$true] %s22
      %28 = dma.hbm_to_vmem [thread:$0]  %s0, 256, %s23, [#allocation3], 128, 128, 8
    $region5: #{tpu_custom_call.1} parent=1 // pred_fallthru
      _
    // Predicated region
    $region6: #{tpu_custom_call.1} parent=1 // pred_check
      _
    $region7: #{tpu_custom_call.1} parent=1 // pred_check_branch
      %30 = sbr.rel (0) target = $region9
    $region8: #{tpu_custom_call.1} parent=1 // pred_region
      %s32 = ssub.s32 3072, 3072
      %33 = vsyncadd [#allocation6], %s32
      %s34 = sshll.u32 [#allocation5], 4
      %s35 = int_to_ptr.vmem [resolvable:$true] %s34
      %40 = dma.hbm_to_vmem [thread:$0]  %s1, 3072, %s35, [#allocation6], 64, 64, 4
    $region9: #{tpu_custom_call.1} parent=1 // pred_fallthru
      _
    // Predicated region
    $region10: #{tpu_custom_call.1} parent=1 // pred_check
      _
    $region11: #{tpu_custom_call.1} parent=1 // pred_check_branch
      %42 = sbr.rel (0) target = $region13
    $region12: #{tpu_custom_call.1} parent=1 // pred_region
      %s44 = ssub.s32 3072, 3072
      %45 = vsyncadd [#allocation6], %s44
      %s46 = sshll.u32 [#allocation7], 4
      %s47 = int_to_ptr.vmem [resolvable:$true] %s46
      %52 = dma.hbm_to_vmem [thread:$0]  %s2, 3072, %s47, [#allocation6], 64, 64, 4
    $region13: #{tpu_custom_call.1} parent=1 // pred_fallthru
      _
    // Predicated region
    $region14: #{tpu_custom_call.1} parent=1 // pred_check
      _
    $region15: #{tpu_custom_call.1} parent=1 // pred_check_branch
      %54 = sbr.rel (0) target = $region17
    $region16: #{tpu_custom_call.1} parent=1 // pred_region
      _
    $region17: #{tpu_custom_call.1} parent=1 // pred_fallthru
      _
    // Predicated region
    $region18: #{tpu_custom_call.1} parent=1 // pred_check
      _
    $region19: #{tpu_custom_call.1} parent=1 // pred_check_branch
      %56 = sbr.rel (0) target = $region21
    $region20: #{tpu_custom_call.1} parent=1 // pred_region
      _
    $region21: #{tpu_custom_call.1} parent=1 // pred_fallthru
      _
    // Predicated region
    $region22: #{tpu_custom_call.1} parent=1 // pred_check
      _
    $region23: #{tpu_custom_call.1} parent=1 // pred_check_branch
      %58 = sbr.rel (0) target = $region25
    $region24: #{tpu_custom_call.1} parent=1 // pred_region
      _
    $region25: #{tpu_custom_call.1} parent=1 // pred_fallthru
      _
    // Predicated region
    $region26: #{tpu_custom_call.1} parent=1 // pred_check
      _
    $region27: #{tpu_custom_call.1} parent=1 // pred_check_branch
      %60 = sbr.rel (0) target = $region29
    $region28: #{tpu_custom_call.1} parent=1 // pred_region
      _
    $region29: #{tpu_custom_call.1} parent=1 // pred_fallthru
      _
    // Predicated region
    $region30: #{tpu_custom_call.1} parent=1 // pred_check
      _
    $region31: #{tpu_custom_call.1} parent=1 // pred_check_branch
      %62 = sbr.rel (0) target = $region33
    $region32: #{tpu_custom_call.1} parent=1 // pred_region
      %s64 = ssub.s32 2048, 2048
      %65 = vsyncadd [#allocation9], %s64
      %s66 = sshll.u32 [#allocation8], 4
      %s67 = int_to_ptr.vmem [resolvable:$true] %s66
      %72 = dma.hbm_to_vmem [thread:$0]  %s7, 2048, %s67, [#allocation9], 128, 128, 8
    $region33: #{tpu_custom_call.1} parent=1 // pred_fallthru
      _
    // Predicated region
    $region34: #{tpu_custom_call.1} parent=1 // pred_check
      _
    $region35: #{tpu_custom_call.1} parent=1 // pred_check_branch
      %74 = sbr.rel (0) target = $region37
    $region36: #{tpu_custom_call.1} parent=1 // pred_region
      %75 = dma.done [#allocation3], 256
    $region37: #{tpu_custom_call.1} parent=1 // pred_fallthru
      _
    // Predicated region
    $region38: #{tpu_custom_call.1} parent=1 // pred_check
      _
    $region39: #{tpu_custom_call.1} parent=1 // pred_check_branch
      %77 = sbr.rel (0) target = $region41
    $region40: #{tpu_custom_call.1} parent=1 // pred_region
      %78 = dma.done [#allocation6], 3072
    $region41: #{tpu_custom_call.1} parent=1 // pred_fallthru
      _
    // Predicated region
    $region42: #{tpu_custom_call.1} parent=1 // pred_check
      _
    $region43: #{tpu_custom_call.1} parent=1 // pred_check_branch
      %80 = sbr.rel (0) target = $region45
    $region44: #{tpu_custom_call.1} parent=1 // pred_region
      %81 = dma.done [#allocation6], 3072
    $region45: #{tpu_custom_call.1} parent=1 // pred_fallthru
      _
    // Predicated region
    $region46: #{tpu_custom_call.1} parent=1 // pred_check
      _
    $region47: #{tpu_custom_call.1} parent=1 // pred_check_branch
      %83 = sbr.rel (0) target = $region49
    $region48: #{tpu_custom_call.1} parent=1 // pred_region
      %84 = dma.done [#allocation9], 2048
    $region49: #{tpu_custom_call.1} parent=1 // pred_fallthru
      _
    %v86 = vld [vmem:[#allocation2] sm:$0xff]
    %v87 = vld [vmem:[#allocation2 + $0x8] sm:$0xff]
    %v88 = vlaneseq
    %v89 = vshrl.u32 %v88, 7
    %v90 = vadd.s32 %v89, 8
    %vm91 = vcmp.lt.s32.totalorder %v89, 0
    %v92 = vsub.s32 0, %v89
    %v93 = vsel %vm91, %v92, %v89
    %v94 = vshrl.u32 %v93, 3
    %v95 = vand.u32 %v93, 7
    %v96 = vsub.s32 0, %v95
    %v97 = vsel %vm91, %v96, %v95
    %vm98 = vcmp.lt.s32.totalorder %v90, 0
    %v99 = vsub.s32 0, %v90
    %v100 = vsel %vm98, %v99, %v90
    %v101 = vshrl.u32 %v100, 3
    %v102 = vand.u32 %v100, 7
    %v103 = vsub.s32 0, %v102
    %v104 = vsel %vm98, %v103, %v102
    %vm105 = vcmp.ne.s32.totalorder %v97, 0
    %vm106 = vcmp.ne.s32.totalorder %v104, 0
    %vm107 = vcmp.lt.s32.totalorder %v97, 0
    %vm108 = vcmp.lt.s32.totalorder %v104, 0
    %vm109 = vmand %vm107, %vm105
    %vm110 = vmand %vm108, %vm106
    %v111 = vadd.s32 %v97, 8
    %v112 = vadd.s32 %v104, 8
    %v113 = vsel %vm109, %v111, %v97
    %v114 = vsel %vm110, %v112, %v104
    %vm117 = vcmask 1040384
    %v118 = vrot.slane %v86, 7
    %v119 = vrot.slane %v87, 7
    %v120 = vsel %vm117, %v118, %v119
    %v123 = vsel %vm117, 0.0, %v118
    %vm124 = vcmp.eq.s32.totalorder %v113, 0
    %vm125 = vcmp.eq.s32.totalorder %v114, 0
    %v126 = vsel %vm124, 0.0, %v123
    %v127 = vsel %vm125, 0.0, %v120
    %vm128 = vcmask 1046528
    %v129 = vrot.slane %v86, 1
    %v130 = vrot.slane %v87, 1
    %v131 = vsel %vm128, %v129, %v130
    %v134 = vsel %vm128, %v130, 0.0
    %vm135 = vcmp.eq.s32.totalorder %v113, 7
    %vm136 = vcmp.eq.s32.totalorder %v114, 7
    %v137 = vsel %vm135, 0.0, %v131
    %v138 = vsel %vm136, 0.0, %v134
    %v139 = vpack.c.bf16 %v127, %v126
    %v140 = vpack.c.bf16 %v87, %v86
    %v141 = vpack.c.bf16 %v138, %v137
    %v142 = vld [vmem:[#allocation5] sm:$0xf]
    %v143 = vld [vmem:[#allocation5 + $0x4] sm:$0xf]
    %v144 = vld [vmem:[#allocation5 + $0x8] sm:$0xf]
    %v145 = vld [vmem:[#allocation5 + $0xc] sm:$0xf]
    %v146 = vld [vmem:[#allocation5 + $0x10] sm:$0xf]
    %v147 = vld [vmem:[#allocation5 + $0x14] sm:$0xf]
    %v148 = vld [vmem:[#allocation5 + $0x18] sm:$0xf]
    %v149 = vld [vmem:[#allocation5 + $0x1c] sm:$0xf]
    %v150 = vld [vmem:[#allocation5 + $0x20] sm:$0xf]
    %v151 = vld [vmem:[#allocation5 + $0x24] sm:$0xf]
    %v152 = vld [vmem:[#allocation5 + $0x28] sm:$0xf]
    %v153 = vld [vmem:[#allocation5 + $0x2c] sm:$0xf]
    %v154 = vld [vmem:[#allocation5 + $0x30] sm:$0xf]
    %v155 = vld [vmem:[#allocation5 + $0x34] sm:$0xf]
    %v156 = vld [vmem:[#allocation5 + $0x38] sm:$0xf]
    %v157 = vld [vmem:[#allocation5 + $0x3c] sm:$0xf]
    %v158 = vld [vmem:[#allocation5 + $0x40] sm:$0xf]
    %v159 = vld [vmem:[#allocation5 + $0x44] sm:$0xf]
    %v160 = vld [vmem:[#allocation5 + $0x48] sm:$0xf]
    %v161 = vld [vmem:[#allocation5 + $0x4c] sm:$0xf]
    %v162 = vld [vmem:[#allocation5 + $0x50] sm:$0xf]
    %v163 = vld [vmem:[#allocation5 + $0x54] sm:$0xf]
    %v164 = vld [vmem:[#allocation5 + $0x58] sm:$0xf]
    %v165 = vld [vmem:[#allocation5 + $0x5c] sm:$0xf]
    %v166 = vld [vmem:[#allocation5 + $0x60] sm:$0xf]
    %v167 = vld [vmem:[#allocation5 + $0x64] sm:$0xf]
    %v168 = vld [vmem:[#allocation5 + $0x68] sm:$0xf]
    %v169 = vld [vmem:[#allocation5 + $0x6c] sm:$0xf]
    %v170 = vld [vmem:[#allocation5 + $0x70] sm:$0xf]
    %v171 = vld [vmem:[#allocation5 + $0x74] sm:$0xf]
    %v172 = vld [vmem:[#allocation5 + $0x78] sm:$0xf]
    %v173 = vld [vmem:[#allocation5 + $0x7c] sm:$0xf]
    %v174 = vld [vmem:[#allocation5 + $0x80] sm:$0xf]
    %v175 = vld [vmem:[#allocation5 + $0x84] sm:$0xf]
    %v176 = vld [vmem:[#allocation5 + $0x88] sm:$0xf]
    %v177 = vld [vmem:[#allocation5 + $0x8c] sm:$0xf]
    %v178 = vld [vmem:[#allocation5 + $0x90] sm:$0xf]
    %v179 = vld [vmem:[#allocation5 + $0x94] sm:$0xf]
    %v180 = vld [vmem:[#allocation5 + $0x98] sm:$0xf]
    %v181 = vld [vmem:[#allocation5 + $0x9c] sm:$0xf]
    %v182 = vld [vmem:[#allocation5 + $0xa0] sm:$0xf]
    %v183 = vld [vmem:[#allocation5 + $0xa4] sm:$0xf]
    %v184 = vld [vmem:[#allocation5 + $0xa8] sm:$0xf]
    %v185 = vld [vmem:[#allocation5 + $0xac] sm:$0xf]
    %v186 = vld [vmem:[#allocation5 + $0xb0] sm:$0xf]
    %v187 = vld [vmem:[#allocation5 + $0xb4] sm:$0xf]
    %v188 = vld [vmem:[#allocation5 + $0xb8] sm:$0xf]
    %v189 = vld [vmem:[#allocation5 + $0xbc] sm:$0xf]
    %v238 = vunpack.c.l.b16 %v142
    %v239 = vunpack.c.l.b16 %v143
    %v240 = vunpack.c.l.b16 %v144
    %v241 = vunpack.c.l.b16 %v145
    %v242 = vunpack.c.l.b16 %v146
    %v243 = vunpack.c.l.b16 %v147
    %v244 = vunpack.c.l.b16 %v148
    %v245 = vunpack.c.l.b16 %v149
    %v246 = vunpack.c.l.b16 %v150
    %v247 = vunpack.c.l.b16 %v151
    %v248 = vunpack.c.l.b16 %v152
    %v249 = vunpack.c.l.b16 %v153
    %v250 = vunpack.c.l.b16 %v154
    %v251 = vunpack.c.l.b16 %v155
    %v252 = vunpack.c.l.b16 %v156
    %v253 = vunpack.c.l.b16 %v157
    %v254 = vunpack.c.l.b16 %v158
    %v255 = vunpack.c.l.b16 %v159
    %v256 = vunpack.c.l.b16 %v160
    %v257 = vunpack.c.l.b16 %v161
    %v258 = vunpack.c.l.b16 %v162
    %v259 = vunpack.c.l.b16 %v163
    %v260 = vunpack.c.l.b16 %v164
    %v261 = vunpack.c.l.b16 %v165
    %v262 = vunpack.c.l.b16 %v166
    %v263 = vunpack.c.l.b16 %v167
    %v264 = vunpack.c.l.b16 %v168
    %v265 = vunpack.c.l.b16 %v169
    %v266 = vunpack.c.l.b16 %v170
    %v267 = vunpack.c.l.b16 %v171
    %v268 = vunpack.c.l.b16 %v172
    %v269 = vunpack.c.l.b16 %v173
    %v270 = vunpack.c.l.b16 %v174
    %v271 = vunpack.c.l.b16 %v175
    %v272 = vunpack.c.l.b16 %v176
    %v273 = vunpack.c.l.b16 %v177
    %v274 = vunpack.c.l.b16 %v178
    %v275 = vunpack.c.l.b16 %v179
    %v276 = vunpack.c.l.b16 %v180
    %v277 = vunpack.c.l.b16 %v181
    %v278 = vunpack.c.l.b16 %v182
    %v279 = vunpack.c.l.b16 %v183
    %v280 = vunpack.c.l.b16 %v184
    %v281 = vunpack.c.l.b16 %v185
    %v282 = vunpack.c.l.b16 %v186
    %v283 = vunpack.c.l.b16 %v187
    %v284 = vunpack.c.l.b16 %v188
    %v285 = vunpack.c.l.b16 %v189
    %v286 = vpack.c.b16 %v239, %v238
    %v287 = vpack.c.b16 %v241, %v240
    %v288 = vpack.c.b16 %v243, %v242
    %v289 = vpack.c.b16 %v245, %v244
    %v290 = vpack.c.b16 %v247, %v246
    %v291 = vpack.c.b16 %v249, %v248
    %v292 = vpack.c.b16 %v251, %v250
    %v293 = vpack.c.b16 %v253, %v252
    %v294 = vpack.c.b16 %v255, %v254
    %v295 = vpack.c.b16 %v257, %v256
    %v296 = vpack.c.b16 %v259, %v258
    %v297 = vpack.c.b16 %v261, %v260
    %v298 = vpack.c.b16 %v263, %v262
    %v299 = vpack.c.b16 %v265, %v264
    %v300 = vpack.c.b16 %v267, %v266
    %v301 = vpack.c.b16 %v269, %v268
    %v302 = vpack.c.b16 %v271, %v270
    %v303 = vpack.c.b16 %v273, %v272
    %v304 = vpack.c.b16 %v275, %v274
    %v305 = vpack.c.b16 %v277, %v276
    %v306 = vpack.c.b16 %v279, %v278
    %v307 = vpack.c.b16 %v281, %v280
    %v308 = vpack.c.b16 %v283, %v282
    %v309 = vpack.c.b16 %v285, %v284
    %334 = vmatprep.subr.bf16.mxu0 0
    %335 = vmatpush1.bf16.msra.mxu0 %v286
    %336 = vmatprep.subr.bf16.mxu0 0
    %337 = vmatpush1.bf16.msra.mxu0 %v287
    %338 = vmatprep.subr.bf16.mxu0 0
    %339 = vmatpush1.bf16.msra.mxu0 %v288
    %340 = vmatprep.subr.bf16.mxu0 0
    %341 = vmatpush1.bf16.msra.mxu0 %v289
    %342 = vmatprep.subr.bf16.mxu0 0
    %343 = vmatpush1.bf16.msra.mxu0 %v290
    %344 = vmatprep.subr.bf16.mxu0 0
    %345 = vmatpush1.bf16.msra.mxu0 %v291
    %346 = vmatprep.subr.bf16.mxu0 0
    %347 = vmatpush1.bf16.msra.mxu0 %v292
    %348 = vmatprep.subr.bf16.mxu0 0
    %349 = vmatpush1.bf16.msra.mxu0 %v293
    %350 = vmatprep.subr.bf16.mxu0 0
    %351 = vmatpush1.bf16.msra.mxu0 %v294
    %352 = vmatprep.subr.bf16.mxu0 0
    %353 = vmatpush1.bf16.msra.mxu0 %v295
    %354 = vmatprep.subr.bf16.mxu0 0
    %355 = vmatpush1.bf16.msra.mxu0 %v296
    %356 = vmatprep.subr.bf16.mxu0 0
    %357 = vmatpush1.bf16.msra.mxu0 %v297
    %358 = vmatprep.subr.bf16.mxu0 0
    %359 = vmatpush1.bf16.msra.mxu0 %v298
    %360 = vmatprep.subr.bf16.mxu0 0
    %361 = vmatpush1.bf16.msra.mxu0 %v299
    %362 = vmatprep.subr.bf16.mxu0 0
    %363 = vmatpush1.bf16.msra.mxu0 %v300
    %364 = vmatprep.subr.bf16.mxu0 0
    %365 = vmatpush1.bf16.msra.mxu0 %v301
    %366 = vmatprep.mubr.bf16.mxu0 %v140
    %367 = vmatmul.mubr.bf16.gmra.mrb[0].mxu0 %v139
    %v368 = vpop.f32.mrb[0].mxu0
    %v369 = vadd.f32 0.0, %v368
    %v370 = vpop.f32.mrb[0].mxu0
    %v371 = vpop.f32.mrb[0].mxu0
    %v372 = vadd.f32 0.0, %v371
    %v373 = vpop.f32.mrb[0].mxu0
    %374 = vdwg.mxu0
    %375 = vmatprep.subr.bf16.mxu0 0
    %376 = vmatpush1.bf16.msra.mxu0 %v302
    %377 = vmatprep.subr.bf16.mxu0 0
    %378 = vmatpush1.bf16.msra.mxu0 %v303
    %379 = vmatprep.subr.bf16.mxu0 0
    %380 = vmatpush1.bf16.msra.mxu0 %v304
    %381 = vmatprep.subr.bf16.mxu0 0
    %382 = vmatpush1.bf16.msra.mxu0 %v305
    %383 = vmatprep.subr.bf16.mxu0 0
    %384 = vmatpush1.bf16.msra.mxu0 %v306
    %385 = vmatprep.subr.bf16.mxu0 0
    %386 = vmatpush1.bf16.msra.mxu0 %v307
    %387 = vmatprep.subr.bf16.mxu0 0
    %388 = vmatpush1.bf16.msra.mxu0 %v308
    %389 = vmatprep.subr.bf16.mxu0 0
    %390 = vmatpush1.bf16.msra.mxu0 %v309
    %391 = vmatprep.subr.bf16.mxu0 0
    %392 = vmatpush1.bf16.msra.mxu0 0
    %393 = vmatprep.subr.bf16.mxu0 0
    %394 = vmatpush1.bf16.msra.mxu0 0
    %395 = vmatprep.subr.bf16.mxu0 0
    %396 = vmatpush1.bf16.msra.mxu0 0
    %397 = vmatprep.subr.bf16.mxu0 0
    %398 = vmatpush1.bf16.msra.mxu0 0
    %399 = vmatprep.subr.bf16.mxu0 0
    %400 = vmatpush1.bf16.msra.mxu0 0
    %401 = vmatprep.subr.bf16.mxu0 0
    %402 = vmatpush1.bf16.msra.mxu0 0
    %403 = vmatprep.subr.bf16.mxu0 0
    %404 = vmatpush1.bf16.msra.mxu0 0
    %405 = vmatprep.subr.bf16.mxu0 0
    %406 = vmatpush1.bf16.msra.mxu0 0
    %407 = vmatprep.mubr.bf16.mxu0 0
    %408 = vmatmul.mubr.bf16.gmra.mrb[0].mxu0 %v141
    %v409 = vpop.f32.mrb[0].mxu0
    %v410 = vadd.f32 %v369, %v409
    %v411 = vpop.f32.mrb[0].mxu0
    %v412 = vpop.f32.mrb[0].mxu0
    %v413 = vadd.f32 %v372, %v412
    %v414 = vpop.f32.mrb[0].mxu0
    %415 = vdwg.mxu0
    %v416 = vadd.f32 %v410, %v413
    %v417 = vrot.slane %v416, 4
    %v418 = vadd.f32 %v416, %v417
    %v419 = vrot.slane %v418, 2
    %v420 = vadd.f32 %v418, %v419
    %v421 = vrot.slane %v420, 1
    %v422 = vadd.f32 %v420, %v421
    %v423 = vmul.f32 %v410, %v410
    %v424 = vmul.f32 %v413, %v413
    %v425 = vadd.f32 %v423, %v424
    %v426 = vrot.slane %v425, 4
    %v427 = vadd.f32 %v425, %v426
    %v428 = vrot.slane %v427, 2
    %v429 = vadd.f32 %v427, %v428
    %v430 = vrot.slane %v429, 1
    %v431 = vadd.f32 %v429, %v430
    %v432 = vsel %vm117, %v422, %v431
    %v433 = vld [vmem:[#allocation8] sm:$0xff]
    %v434 = vld [vmem:[#allocation8 + $0x8] sm:$0xff]
    %v435 = vld [vmem:[#allocation8 + $0x10] sm:$0xff]
    %v436 = vld [vmem:[#allocation8 + $0x18] sm:$0xff]
    %v437 = vld [vmem:[#allocation8 + $0x20] sm:$0xff]
    %v438 = vld [vmem:[#allocation8 + $0x28] sm:$0xff]
    %v439 = vld [vmem:[#allocation8 + $0x30] sm:$0xff]
    %v440 = vld [vmem:[#allocation8 + $0x38] sm:$0xff]
    %v441 = vld [vmem:[#allocation8 + $0x40] sm:$0xff]
    %v442 = vld [vmem:[#allocation8 + $0x48] sm:$0xff]
    %v443 = vld [vmem:[#allocation8 + $0x50] sm:$0xff]
    %v444 = vld [vmem:[#allocation8 + $0x58] sm:$0xff]
    %v445 = vld [vmem:[#allocation8 + $0x60] sm:$0xff]
    %v446 = vld [vmem:[#allocation8 + $0x68] sm:$0xff]
    %v447 = vld [vmem:[#allocation8 + $0x70] sm:$0xff]
    %v448 = vld [vmem:[#allocation8 + $0x78] sm:$0xff]
    %449 = vmatprep.subr.mxu0 0.0
    %450 = vmatpush1.msra.mxu0 %v433
    %451 = vmatprep.subr.mxu0 0.0
    %452 = vmatpush1.msra.mxu0 %v434
    %453 = vmatprep.subr.mxu0 0.0
    %454 = vmatpush1.msra.mxu0 %v435
    %455 = vmatprep.subr.mxu0 0.0
    %456 = vmatpush1.msra.mxu0 %v436
    %457 = vmatprep.subr.mxu0 0.0
    %458 = vmatpush1.msra.mxu0 %v437
    %459 = vmatprep.subr.mxu0 0.0
    %460 = vmatpush1.msra.mxu0 %v438
    %461 = vmatprep.subr.mxu0 0.0
    %462 = vmatpush1.msra.mxu0 %v439
    %463 = vmatprep.subr.mxu0 0.0
    %464 = vmatpush1.msra.mxu0 %v440
    %465 = vmatprep.subr.mxu0 0.0
    %466 = vmatpush1.msra.mxu0 %v441
    %467 = vmatprep.subr.mxu0 0.0
    %468 = vmatpush1.msra.mxu0 %v442
    %469 = vmatprep.subr.mxu0 0.0
    %470 = vmatpush1.msra.mxu0 %v443
    %471 = vmatprep.subr.mxu0 0.0
    %472 = vmatpush1.msra.mxu0 %v444
    %473 = vmatprep.subr.mxu0 0.0
    %474 = vmatpush1.msra.mxu0 %v445
    %475 = vmatprep.subr.mxu0 0.0
    %476 = vmatpush1.msra.mxu0 %v446
    %477 = vmatprep.subr.mxu0 0.0
    %478 = vmatpush1.msra.mxu0 %v447
    %479 = vmatprep.subr.mxu0 0.0
    %480 = vmatpush1.msra.mxu0 %v448
    %481 = vmatprep.subr.mxu0 0.0
    %482 = vmatpush1.msra.mxu0 0.0
    %483 = vmatprep.subr.mxu0 0.0
    %484 = vmatpush1.msra.mxu0 0.0
    %485 = vmatprep.subr.mxu0 0.0
    %486 = vmatpush1.msra.mxu0 0.0
    %487 = vmatprep.subr.mxu0 0.0
    %488 = vmatpush1.msra.mxu0 0.0
    %489 = vmatprep.subr.mxu0 0.0
    %490 = vmatpush1.msra.mxu0 0.0
    %491 = vmatprep.subr.mxu0 0.0
    %492 = vmatpush1.msra.mxu0 0.0
    %493 = vmatprep.subr.mxu0 0.0
    %494 = vmatpush1.msra.mxu0 0.0
    %495 = vmatprep.subr.mxu0 0.0
    %496 = vmatpush1.msra.mxu0 0.0
    %497 = vmatprep.subr.mxu0 0.0
    %498 = vmatpush1.msra.mxu0 0.0
    %499 = vmatprep.subr.mxu0 0.0
    %500 = vmatpush1.msra.mxu0 0.0
    %501 = vmatprep.subr.mxu0 0.0
    %502 = vmatpush1.msra.mxu0 0.0
    %503 = vmatprep.subr.mxu0 0.0
    %504 = vmatpush1.msra.mxu0 0.0
    %505 = vmatprep.subr.mxu0 0.0
    %506 = vmatpush1.msra.mxu0 0.0
    %507 = vmatprep.subr.mxu0 0.0
    %508 = vmatpush1.msra.mxu0 0.0
    %509 = vmatprep.subr.mxu0 0.0
    %510 = vmatpush1.msra.mxu0 0.0
    %511 = vmatprep.subr.mxu0 0.0
    %512 = vmatpush1.msra.mxu0 0.0
    %513 = vmatprep.mubr.f32.mxu0 0.0
    %514 = vmatmul.mubr.f32.gmra.mrb[0].mxu0 %v432
    %v515 = vpop.f32.mrb[0].mxu0
    %v516 = vadd.f32 0.0, %v515
    %v517 = vpop.f32.mrb[0].mxu0
    %518 = vdwg.mxu0
    %v519 = vmul.f32 %v516, 0.0078125
    %v520 = vmul.f32 %v519, %v519
    %v522 = vrot.slane %v520, 7
    %v524 = vsub.f32 %v519, %v522
    %v525 = vlaneseq
    %v526 = vshrl.u32 %v525, 7
    %v527 = vsub.s32 0, %v526
    %v528 = vrot.slane %v519, %v527
    %v529 = vsub.f32 %v410, %v528
    %v530 = vsub.f32 %v413, %v528
    %v531 = vadd.f32 %v524, 1e-05
    %v532 = vrsqrt.pop %v531
    %v533 = vlaneseq
    %v534 = vshrl.u32 %v533, 7
    %v535 = vsub.s32 1, %v534
    %v536 = vrot.slane %v532, %v535
    %v537 = vmul.f32 %v529, %v536
    %v538 = vmul.f32 %v530, %v536
    %v539 = vld [vmem:[%s3] sm:$0x1]
    %v541 = vlaneseq
    %v542 = vshrl.u32 %v541, 7
    %v543 = vsub.s32 0, %v542
    %v544 = vrot.slane %v539, %v543
    %v546 = vmul.f32 %v537, %v544
    %v547 = vmul.f32 %v538, %v544
    %v548 = vld [vmem:[%s4] sm:$0x1]
    %v550 = vlaneseq
    %v551 = vshrl.u32 %v550, 7
    %v552 = vsub.s32 0, %v551
    %v553 = vrot.slane %v548, %v552
    %v555 = vadd.f32 %v546, %v553
    %v556 = vadd.f32 %v547, %v553
    %v557 = vmax.f32 %v555, 0.0
    %v558 = vmax.f32 %v556, 0.0
    %v561 = vrot.slane %v557, 7
    %v562 = vrot.slane %v558, 7
    %v563 = vsel %vm117, %v561, %v562
    %v566 = vsel %vm117, 0.0, %v561
    %v567 = vsel %vm124, 0.0, %v566
    %v568 = vsel %vm125, 0.0, %v563
    %v569 = vrot.slane %v557, 1
    %v570 = vrot.slane %v558, 1
    %v571 = vsel %vm128, %v569, %v570
    %v574 = vsel %vm128, %v570, 0.0
    %v575 = vsel %vm135, 0.0, %v571
    %v576 = vsel %vm136, 0.0, %v574
    %v577 = vpack.c.bf16 %v568, %v567
    %v578 = vpack.c.bf16 %v558, %v557
    %v579 = vpack.c.bf16 %v576, %v575
    %v580 = vld [vmem:[#allocation7] sm:$0xf]
    %v581 = vld [vmem:[#allocation7 + $0x4] sm:$0xf]
    %v582 = vld [vmem:[#allocation7 + $0x8] sm:$0xf]
    %v583 = vld [vmem:[#allocation7 + $0xc] sm:$0xf]
    %v584 = vld [vmem:[#allocation7 + $0x10] sm:$0xf]
    %v585 = vld [vmem:[#allocation7 + $0x14] sm:$0xf]
    %v586 = vld [vmem:[#allocation7 + $0x18] sm:$0xf]
    %v587 = vld [vmem:[#allocation7 + $0x1c] sm:$0xf]
    %v588 = vld [vmem:[#allocation7 + $0x20] sm:$0xf]
    %v589 = vld [vmem:[#allocation7 + $0x24] sm:$0xf]
    %v590 = vld [vmem:[#allocation7 + $0x28] sm:$0xf]
    %v591 = vld [vmem:[#allocation7 + $0x2c] sm:$0xf]
    %v592 = vld [vmem:[#allocation7 + $0x30] sm:$0xf]
    %v593 = vld [vmem:[#allocation7 + $0x34] sm:$0xf]
    %v594 = vld [vmem:[#allocation7 + $0x38] sm:$0xf]
    %v595 = vld [vmem:[#allocation7 + $0x3c] sm:$0xf]
    %v596 = vld [vmem:[#allocation7 + $0x40] sm:$0xf]
    %v597 = vld [vmem:[#allocation7 + $0x44] sm:$0xf]
    %v598 = vld [vmem:[#allocation7 + $0x48] sm:$0xf]
    %v599 = vld [vmem:[#allocation7 + $0x4c] sm:$0xf]
    %v600 = vld [vmem:[#allocation7 + $0x50] sm:$0xf]
    %v601 = vld [vmem:[#allocation7 + $0x54] sm:$0xf]
    %v602 = vld [vmem:[#allocation7 + $0x58] sm:$0xf]
    %v603 = vld [vmem:[#allocation7 + $0x5c] sm:$0xf]
    %v604 = vld [vmem:[#allocation7 + $0x60] sm:$0xf]
    %v605 = vld [vmem:[#allocation7 + $0x64] sm:$0xf]
    %v606 = vld [vmem:[#allocation7 + $0x68] sm:$0xf]
    %v607 = vld [vmem:[#allocation7 + $0x6c] sm:$0xf]
    %v608 = vld [vmem:[#allocation7 + $0x70] sm:$0xf]
    %v609 = vld [vmem:[#allocation7 + $0x74] sm:$0xf]
    %v610 = vld [vmem:[#allocation7 + $0x78] sm:$0xf]
    %v611 = vld [vmem:[#allocation7 + $0x7c] sm:$0xf]
    %v612 = vld [vmem:[#allocation7 + $0x80] sm:$0xf]
    %v613 = vld [vmem:[#allocation7 + $0x84] sm:$0xf]
    %v614 = vld [vmem:[#allocation7 + $0x88] sm:$0xf]
    %v615 = vld [vmem:[#allocation7 + $0x8c] sm:$0xf]
    %v616 = vld [vmem:[#allocation7 + $0x90] sm:$0xf]
    %v617 = vld [vmem:[#allocation7 + $0x94] sm:$0xf]
    %v618 = vld [vmem:[#allocation7 + $0x98] sm:$0xf]
    %v619 = vld [vmem:[#allocation7 + $0x9c] sm:$0xf]
    %v620 = vld [vmem:[#allocation7 + $0xa0] sm:$0xf]
    %v621 = vld [vmem:[#allocation7 + $0xa4] sm:$0xf]
    %v622 = vld [vmem:[#allocation7 + $0xa8] sm:$0xf]
    %v623 = vld [vmem:[#allocation7 + $0xac] sm:$0xf]
    %v624 = vld [vmem:[#allocation7 + $0xb0] sm:$0xf]
    %v625 = vld [vmem:[#allocation7 + $0xb4] sm:$0xf]
    %v626 = vld [vmem:[#allocation7 + $0xb8] sm:$0xf]
    %v627 = vld [vmem:[#allocation7 + $0xbc] sm:$0xf]
    %v676 = vunpack.c.l.b16 %v580
    %v677 = vunpack.c.l.b16 %v581
    %v678 = vunpack.c.l.b16 %v582
    %v679 = vunpack.c.l.b16 %v583
    %v680 = vunpack.c.l.b16 %v584
    %v681 = vunpack.c.l.b16 %v585
    %v682 = vunpack.c.l.b16 %v586
    %v683 = vunpack.c.l.b16 %v587
    %v684 = vunpack.c.l.b16 %v588
    %v685 = vunpack.c.l.b16 %v589
    %v686 = vunpack.c.l.b16 %v590
    %v687 = vunpack.c.l.b16 %v591
    %v688 = vunpack.c.l.b16 %v592
    %v689 = vunpack.c.l.b16 %v593
    %v690 = vunpack.c.l.b16 %v594
    %v691 = vunpack.c.l.b16 %v595
    %v692 = vunpack.c.l.b16 %v596
    %v693 = vunpack.c.l.b16 %v597
    %v694 = vunpack.c.l.b16 %v598
    %v695 = vunpack.c.l.b16 %v599
    %v696 = vunpack.c.l.b16 %v600
    %v697 = vunpack.c.l.b16 %v601
    %v698 = vunpack.c.l.b16 %v602
    %v699 = vunpack.c.l.b16 %v603
    %v700 = vunpack.c.l.b16 %v604
    %v701 = vunpack.c.l.b16 %v605
    %v702 = vunpack.c.l.b16 %v606
    %v703 = vunpack.c.l.b16 %v607
    %v704 = vunpack.c.l.b16 %v608
    %v705 = vunpack.c.l.b16 %v609
    %v706 = vunpack.c.l.b16 %v610
    %v707 = vunpack.c.l.b16 %v611
    %v708 = vunpack.c.l.b16 %v612
    %v709 = vunpack.c.l.b16 %v613
    %v710 = vunpack.c.l.b16 %v614
    %v711 = vunpack.c.l.b16 %v615
    %v712 = vunpack.c.l.b16 %v616
    %v713 = vunpack.c.l.b16 %v617
    %v714 = vunpack.c.l.b16 %v618
    %v715 = vunpack.c.l.b16 %v619
    %v716 = vunpack.c.l.b16 %v620
    %v717 = vunpack.c.l.b16 %v621
    %v718 = vunpack.c.l.b16 %v622
    %v719 = vunpack.c.l.b16 %v623
    %v720 = vunpack.c.l.b16 %v624
    %v721 = vunpack.c.l.b16 %v625
    %v722 = vunpack.c.l.b16 %v626
    %v723 = vunpack.c.l.b16 %v627
    %v724 = vpack.c.b16 %v677, %v676
    %v725 = vpack.c.b16 %v679, %v678
    %v726 = vpack.c.b16 %v681, %v680
    %v727 = vpack.c.b16 %v683, %v682
    %v728 = vpack.c.b16 %v685, %v684
    %v729 = vpack.c.b16 %v687, %v686
    %v730 = vpack.c.b16 %v689, %v688
    %v731 = vpack.c.b16 %v691, %v690
    %v732 = vpack.c.b16 %v693, %v692
    %v733 = vpack.c.b16 %v695, %v694
    %v734 = vpack.c.b16 %v697, %v696
    %v735 = vpack.c.b16 %v699, %v698
    %v736 = vpack.c.b16 %v701, %v700
    %v737 = vpack.c.b16 %v703, %v702
    %v738 = vpack.c.b16 %v705, %v704
    %v739 = vpack.c.b16 %v707, %v706
    %v740 = vpack.c.b16 %v709, %v708
    %v741 = vpack.c.b16 %v711, %v710
    %v742 = vpack.c.b16 %v713, %v712
    %v743 = vpack.c.b16 %v715, %v714
    %v744 = vpack.c.b16 %v717, %v716
    %v745 = vpack.c.b16 %v719, %v718
    %v746 = vpack.c.b16 %v721, %v720
    %v747 = vpack.c.b16 %v723, %v722
    %772 = vmatprep.subr.bf16.mxu0 0
    %773 = vmatpush1.bf16.msra.mxu0 %v724
    %774 = vmatprep.subr.bf16.mxu0 0
    %775 = vmatpush1.bf16.msra.mxu0 %v725
    %776 = vmatprep.subr.bf16.mxu0 0
    %777 = vmatpush1.bf16.msra.mxu0 %v726
    %778 = vmatprep.subr.bf16.mxu0 0
    %779 = vmatpush1.bf16.msra.mxu0 %v727
    %780 = vmatprep.subr.bf16.mxu0 0
    %781 = vmatpush1.bf16.msra.mxu0 %v728
    %782 = vmatprep.subr.bf16.mxu0 0
    %783 = vmatpush1.bf16.msra.mxu0 %v729
    %784 = vmatprep.subr.bf16.mxu0 0
    %785 = vmatpush1.bf16.msra.mxu0 %v730
    %786 = vmatprep.subr.bf16.mxu0 0
    %787 = vmatpush1.bf16.msra.mxu0 %v731
    %788 = vmatprep.subr.bf16.mxu0 0
    %789 = vmatpush1.bf16.msra.mxu0 %v732
    %790 = vmatprep.subr.bf16.mxu0 0
    %791 = vmatpush1.bf16.msra.mxu0 %v733
    %792 = vmatprep.subr.bf16.mxu0 0
    %793 = vmatpush1.bf16.msra.mxu0 %v734
    %794 = vmatprep.subr.bf16.mxu0 0
    %795 = vmatpush1.bf16.msra.mxu0 %v735
    %796 = vmatprep.subr.bf16.mxu0 0
    %797 = vmatpush1.bf16.msra.mxu0 %v736
    %798 = vmatprep.subr.bf16.mxu0 0
    %799 = vmatpush1.bf16.msra.mxu0 %v737
    %800 = vmatprep.subr.bf16.mxu0 0
    %801 = vmatpush1.bf16.msra.mxu0 %v738
    %802 = vmatprep.subr.bf16.mxu0 0
    %803 = vmatpush1.bf16.msra.mxu0 %v739
    %804 = vmatprep.mubr.bf16.mxu0 %v578
    %805 = vmatmul.mubr.bf16.gmra.mrb[0].mxu0 %v577
    %v806 = vpop.f32.mrb[0].mxu0
    %v807 = vadd.f32 0.0, %v806
    %v808 = vpop.f32.mrb[0].mxu0
    %v809 = vpop.f32.mrb[0].mxu0
    %v810 = vadd.f32 0.0, %v809
    %v811 = vpop.f32.mrb[0].mxu0
    %812 = vdwg.mxu0
    %813 = vmatprep.subr.bf16.mxu0 0
    %814 = vmatpush1.bf16.msra.mxu0 %v740
    %815 = vmatprep.subr.bf16.mxu0 0
    %816 = vmatpush1.bf16.msra.mxu0 %v741
    %817 = vmatprep.subr.bf16.mxu0 0
    %818 = vmatpush1.bf16.msra.mxu0 %v742
    %819 = vmatprep.subr.bf16.mxu0 0
    %820 = vmatpush1.bf16.msra.mxu0 %v743
    %821 = vmatprep.subr.bf16.mxu0 0
    %822 = vmatpush1.bf16.msra.mxu0 %v744
    %823 = vmatprep.subr.bf16.mxu0 0
    %824 = vmatpush1.bf16.msra.mxu0 %v745
    %825 = vmatprep.subr.bf16.mxu0 0
    %826 = vmatpush1.bf16.msra.mxu0 %v746
    %827 = vmatprep.subr.bf16.mxu0 0
    %828 = vmatpush1.bf16.msra.mxu0 %v747
    %829 = vmatprep.subr.bf16.mxu0 0
    %830 = vmatpush1.bf16.msra.mxu0 0
    %831 = vmatprep.subr.bf16.mxu0 0
    %832 = vmatpush1.bf16.msra.mxu0 0
    %833 = vmatprep.subr.bf16.mxu0 0
    %834 = vmatpush1.bf16.msra.mxu0 0
    %835 = vmatprep.subr.bf16.mxu0 0
    %836 = vmatpush1.bf16.msra.mxu0 0
    %837 = vmatprep.subr.bf16.mxu0 0
    %838 = vmatpush1.bf16.msra.mxu0 0
    %839 = vmatprep.subr.bf16.mxu0 0
    %840 = vmatpush1.bf16.msra.mxu0 0
    %841 = vmatprep.subr.bf16.mxu0 0
    %842 = vmatpush1.bf16.msra.mxu0 0
    %843 = vmatprep.subr.bf16.mxu0 0
    %844 = vmatpush1.bf16.msra.mxu0 0
    %845 = vmatprep.mubr.bf16.mxu0 0
    %846 = vmatmul.mubr.bf16.gmra.mrb[0].mxu0 %v579
    %v847 = vpop.f32.mrb[0].mxu0
    %v848 = vadd.f32 %v807, %v847
    %v849 = vpop.f32.mrb[0].mxu0
    %v850 = vpop.f32.mrb[0].mxu0
    %v851 = vadd.f32 %v810, %v850
    %v852 = vpop.f32.mrb[0].mxu0
    %853 = vdwg.mxu0
    %v854 = vadd.f32 %v848, %v851
    %v855 = vrot.slane %v854, 4
    %v856 = vadd.f32 %v854, %v855
    %v857 = vrot.slane %v856, 2
    %v858 = vadd.f32 %v856, %v857
    %v859 = vrot.slane %v858, 1
    %v860 = vadd.f32 %v858, %v859
    %v861 = vmul.f32 %v848, %v848
    %v862 = vmul.f32 %v851, %v851
    %v863 = vadd.f32 %v861, %v862
    %v864 = vrot.slane %v863, 4
    %v865 = vadd.f32 %v863, %v864
    %v866 = vrot.slane %v865, 2
    %v867 = vadd.f32 %v865, %v866
    %v868 = vrot.slane %v867, 1
    %v869 = vadd.f32 %v867, %v868
    %v870 = vsel %vm117, %v860, %v869
    %871 = vmatprep.subr.mxu0 0.0
    %872 = vmatpush1.msra.mxu0 %v433
    %873 = vmatprep.subr.mxu0 0.0
    %874 = vmatpush1.msra.mxu0 %v434
    %875 = vmatprep.subr.mxu0 0.0
    %876 = vmatpush1.msra.mxu0 %v435
    %877 = vmatprep.subr.mxu0 0.0
    %878 = vmatpush1.msra.mxu0 %v436
    %879 = vmatprep.subr.mxu0 0.0
    %880 = vmatpush1.msra.mxu0 %v437
    %881 = vmatprep.subr.mxu0 0.0
    %882 = vmatpush1.msra.mxu0 %v438
    %883 = vmatprep.subr.mxu0 0.0
    %884 = vmatpush1.msra.mxu0 %v439
    %885 = vmatprep.subr.mxu0 0.0
    %886 = vmatpush1.msra.mxu0 %v440
    %887 = vmatprep.subr.mxu0 0.0
    %888 = vmatpush1.msra.mxu0 %v441
    %889 = vmatprep.subr.mxu0 0.0
    %890 = vmatpush1.msra.mxu0 %v442
    %891 = vmatprep.subr.mxu0 0.0
    %892 = vmatpush1.msra.mxu0 %v443
    %893 = vmatprep.subr.mxu0 0.0
    %894 = vmatpush1.msra.mxu0 %v444
    %895 = vmatprep.subr.mxu0 0.0
    %896 = vmatpush1.msra.mxu0 %v445
    %897 = vmatprep.subr.mxu0 0.0
    %898 = vmatpush1.msra.mxu0 %v446
    %899 = vmatprep.subr.mxu0 0.0
    %900 = vmatpush1.msra.mxu0 %v447
    %901 = vmatprep.subr.mxu0 0.0
    %902 = vmatpush1.msra.mxu0 %v448
    %903 = vmatprep.subr.mxu0 0.0
    %904 = vmatpush1.msra.mxu0 0.0
    %905 = vmatprep.subr.mxu0 0.0
    %906 = vmatpush1.msra.mxu0 0.0
    %907 = vmatprep.subr.mxu0 0.0
    %908 = vmatpush1.msra.mxu0 0.0
    %909 = vmatprep.subr.mxu0 0.0
    %910 = vmatpush1.msra.mxu0 0.0
    %911 = vmatprep.subr.mxu0 0.0
    %912 = vmatpush1.msra.mxu0 0.0
    %913 = vmatprep.subr.mxu0 0.0
    %914 = vmatpush1.msra.mxu0 0.0
    %915 = vmatprep.subr.mxu0 0.0
    %916 = vmatpush1.msra.mxu0 0.0
    %917 = vmatprep.subr.mxu0 0.0
    %918 = vmatpush1.msra.mxu0 0.0
    %919 = vmatprep.subr.mxu0 0.0
    %920 = vmatpush1.msra.mxu0 0.0
    %921 = vmatprep.subr.mxu0 0.0
    %922 = vmatpush1.msra.mxu0 0.0
    %923 = vmatprep.subr.mxu0 0.0
    %924 = vmatpush1.msra.mxu0 0.0
    %925 = vmatprep.subr.mxu0 0.0
    %926 = vmatpush1.msra.mxu0 0.0
    %927 = vmatprep.subr.mxu0 0.0
    %928 = vmatpush1.msra.mxu0 0.0
    %929 = vmatprep.subr.mxu0 0.0
    %930 = vmatpush1.msra.mxu0 0.0
    %931 = vmatprep.subr.mxu0 0.0
    %932 = vmatpush1.msra.mxu0 0.0
    %933 = vmatprep.subr.mxu0 0.0
    %934 = vmatpush1.msra.mxu0 0.0
    %935 = vmatprep.mubr.f32.mxu0 0.0
    %936 = vmatmul.mubr.f32.gmra.mrb[0].mxu0 %v870
    %v937 = vpop.f32.mrb[0].mxu0
    %v938 = vadd.f32 0.0, %v937
    %v939 = vpop.f32.mrb[0].mxu0
    %940 = vdwg.mxu0
    %v941 = vmul.f32 %v938, 0.0078125
    %v942 = vmul.f32 %v941, %v941
    %v944 = vrot.slane %v942, 7
    %v946 = vsub.f32 %v941, %v944
    %v947 = vlaneseq
    %v948 = vshrl.u32 %v947, 7
    %v949 = vsub.s32 0, %v948
    %v950 = vrot.slane %v941, %v949
    %v951 = vsub.f32 %v848, %v950
    %v952 = vsub.f32 %v851, %v950
    %v953 = vadd.f32 %v946, 1e-05
    %v954 = vrsqrt.pop %v953
    %v955 = vlaneseq
    %v956 = vshrl.u32 %v955, 7
    %v957 = vsub.s32 1, %v956
    %v958 = vrot.slane %v954, %v957
    %v959 = vmul.f32 %v951, %v958
    %v960 = vmul.f32 %v952, %v958
    %v961 = vld [vmem:[%s5] sm:$0x1]
    %v963 = vlaneseq
    %v964 = vshrl.u32 %v963, 7
    %v965 = vsub.s32 0, %v964
    %v966 = vrot.slane %v961, %v965
    %v968 = vmul.f32 %v959, %v966
    %v969 = vmul.f32 %v960, %v966
    %v970 = vld [vmem:[%s6] sm:$0x1]
    %v972 = vlaneseq
    %v973 = vshrl.u32 %v972, 7
    %v974 = vsub.s32 0, %v973
    %v975 = vrot.slane %v970, %v974
    %v977 = vadd.f32 %v968, %v975
    %v978 = vadd.f32 %v969, %v975
    %v979 = vadd.f32 %v977, %v86
    %v980 = vadd.f32 %v978, %v87
    %v981 = vmax.f32 %v979, 0.0
    %v982 = vmax.f32 %v980, 0.0
    %983 = vst [vmem:[#allocation10] sm:$0xff] %v981
    %984 = vst [vmem:[#allocation10 + $0x8] sm:$0xff] %v982
    // Predicated region
    $region50: #{tpu_custom_call.1} parent=1 // pred_check
      _
    $region51: #{tpu_custom_call.1} parent=1 // pred_check_branch
      %986 = sbr.rel (0) target = $region53
    $region52: #{tpu_custom_call.1} parent=1 // pred_region
      %s988 = ssub.s32 256, 256
      %989 = vsyncadd [#allocation4], %s988
      %s990 = sshll.u32 [#allocation10], 4
      %s991 = int_to_ptr.vmem [resolvable:$true] %s990
      %996 = dma.vmem_to_hbm [thread:$0]  %s991, 256, %s8, [#allocation4], 128, 128, 8
    $region53: #{tpu_custom_call.1} parent=1 // pred_fallthru
      _
    // Predicated region
    $region54: #{tpu_custom_call.1} parent=1 // pred_check
      _
    $region55: #{tpu_custom_call.1} parent=1 // pred_check_branch
      %998 = sbr.rel (0) target = $region57
    $region56: #{tpu_custom_call.1} parent=1 // pred_region
      %999 = dma.done [#allocation4], 256
    $region57: #{tpu_custom_call.1} parent=1 // pred_fallthru
      _
    %1000 = vsyncpa [#allocation3], 1
    %1001 = vsyncpa [#allocation6], 1
    %1002 = vsyncpa [#allocation9], 1
    %1003 = vsyncpa [#allocation4], 1

</llo_original>
